<compile_context>
chip_gen: v6e
topology: v6e:2x2x1
jax: 0.10.0
libtpu: 0.0.40
codegen_flags: <defaults>
</compile_context>

<pallas_src>
import jax
import jax.numpy as jnp
from jax.experimental import pallas as pl
from jax.experimental.pallas import tpu as pltpu


def _conv1x1_kernel(x_ref, w_ref, b_ref, o_ref):
    # x_ref: (Nb, C_in, THW)   w_ref: (C_out, C_in)   b_ref: (C_out, 1)
    # o_ref: (Nb, C_out, THW)  -- HW on lanes => lane-dense, unmasked stores.
    w = w_ref[...]
    b = b_ref[...]
    for i in range(x_ref.shape[0]):     # small static unroll over the batch block
        acc = jnp.dot(w, x_ref[i], preferred_element_type=jnp.float32)
        o_ref[i] = (acc + b).astype(o_ref.dtype)


def _vmem_config():
    """(tile budget, scoped vmem limit) per TPU generation."""
    try:
        vmem = pltpu.get_tpu_info().vmem_capacity_bytes
    except Exception:
        vmem = 64 * 1024 * 1024                  # conservative: v7x per-TC VMEM
    if vmem >= 100 * 1024 * 1024:                # v5e / v6e: 128 MiB VMEM
        return 64 * 1024 * 1024, 96 * 1024 * 1024
    return 24 * 1024 * 1024, 48 * 1024 * 1024    # v7x: 64 MiB per TensorCore


def _pick_tiles(n, hw, c_in, c_out, itemsize, vmem_budget_bytes):
    """Pick (batch block Nb, HW tile thw).  Nb divides N; thw is a multiple of
    128 unless it is the full HW extent (so ragged last HW blocks are legal)."""
    # Constant weight/bias blocks (re-DMA skipped, but still double-buffered).
    weight_bytes = 2 * (c_in * c_out + c_out) * itemsize
    budget = max(vmem_budget_bytes - weight_bytes, 256 * 1024)
    # x + out blocks, double-buffered, per pixel per image.
    per_col = 2 * (c_in + c_out) * itemsize

    # ---- HW tile (lane axis): full extent if it fits, else a multiple of 128.
    if hw <= 128 or hw * per_col <= budget:
        thw = hw
    else:
        thw = max(128, min((budget // per_col // 128) * 128, 32768))

    # ---- batch block: fold images until x DMAs are reasonably large.
    target_x_bytes = 512 * 1024
    nb = 1
    for d in range(1, min(n, 8) + 1):
        if n % d != 0:
            continue
        if d * thw * per_col > budget:
            break
        nb = d
        if d * c_in * thw * itemsize >= target_x_bytes:
            break

    # ---- guarantee >= 2 grid steps when possible (v7x has 2 TensorCores).
    if (n // nb) * pl.cdiv(hw, thw) < 2:
        if hw > 128:
            thw = max(128, ((hw // 2 + 127) // 128) * 128)
        elif nb > 1:
            for d in range(nb - 1, 0, -1):
                if n % d == 0:
                    nb = d
                    break
    return nb, thw


def conv1x1_pallas(x_nchw, weight, bias):
    """1x1 convolution (== nn.Conv2d(kernel_size=1)) via a Pallas matmul kernel.

    x_nchw : (N, C_in, H, W)
    weight : (C_out, C_in) or (C_out, C_in, 1, 1)
    bias   : (C_out,)
    returns: (N, C_out, H, W)
    """
    N, C_in, H, W = x_nchw.shape
    weight = weight.reshape(weight.shape[0], C_in)
    C_out = weight.shape[0]
    HW = H * W

    # NCHW is already channels x pixels per image: only a free reshape needed.
    x = x_nchw.reshape(N, C_in, HW)
    w = weight.astype(x.dtype)                      # (C_out, C_in)
    b = bias.reshape(C_out, 1).astype(jnp.float32)  # (C_out, 1)

    vmem_budget, vmem_limit = _vmem_config()
    nb, thw = _pick_tiles(N, HW, C_in, C_out, x.dtype.itemsize, vmem_budget)
    grid = (N // nb, pl.cdiv(HW, thw))

    cost = pl.CostEstimate(
        flops=2 * N * HW * C_in * C_out,
        transcendentals=0,
        bytes_accessed=N * HW * (C_in + C_out) * x.dtype.itemsize
        + (C_in * C_out + C_out) * x.dtype.itemsize,
    )

    out = pl.pallas_call(
        _conv1x1_kernel,
        out_shape=jax.ShapeDtypeStruct((N, C_out, HW), x.dtype),
        grid_spec=pltpu.PrefetchScalarGridSpec(
            num_scalar_prefetch=0,
            grid=grid,
            in_specs=[
                # x: a block of Nb images, full channels, HW tile on lanes.
                pl.BlockSpec((nb, C_in, thw), lambda bi, j: (bi, 0, j)),
                # weight / bias: constant block index (re-DMA is skipped).
                pl.BlockSpec((C_out, C_in), lambda bi, j: (0, 0)),
                pl.BlockSpec((C_out, 1), lambda bi, j: (0, 0)),
            ],
            out_specs=pl.BlockSpec((nb, C_out, thw), lambda bi, j: (bi, 0, j)),
        ),
        compiler_params=pltpu.CompilerParams(
            # Every grid step writes a disjoint output block -> megacore-safe.
            dimension_semantics=("parallel", "parallel"),
            # Per-generation scoped-VMEM limit (above v5e's 16 MiB default,
            # headroom under v7x's 64 MiB per-TC physical VMEM).
            vmem_limit_bytes=vmem_limit,
        ),
        cost_estimate=cost,
    )(x, w, b)

    return out.reshape(N, C_out, H, W)


if __name__ == "__main__":
    key = jax.random.PRNGKey(0)
    k_x, k_w, k_b = jax.random.split(key, 3)

    N, C_in, C_out, Hs, Ws = 2, 4, 8, 16, 16

    x = jax.random.normal(k_x, (N, C_in, Hs, Ws), dtype=jnp.float32)
    # Conv2d(in_channels, out_channels, 1): weight (C_out, C_in, 1, 1).
    weight = jax.random.normal(k_w, (C_out, C_in, 1, 1), dtype=jnp.float32) * 0.1
    bias = jax.random.normal(k_b, (C_out,), dtype=jnp.float32) * 0.1

    out = conv1x1_pallas(x, weight, bias)
    out = jax.block_until_ready(out)

    # Reference (plain JAX einsum == F.conv2d with a 1x1 kernel).
    ref = jnp.einsum("nchw,oc->nohw", x, weight[:, :, 0, 0]) + bias[None, :, None, None]
    assert out.shape == (N, C_out, Hs, Ws)
    assert jnp.allclose(out, ref, atol=1e-5, rtol=1e-5)

    print("KERNEL_OK")
</pallas_src>

<mosaic_0001>
module attributes {stable_mosaic.version = 11 : i64} {
  func.func @_conv1x1_kernel(%arg0: i32, %arg1: i32, %arg2: memref<2x4x128xf32, #tpu.memory_space<vmem>>, %arg3: memref<8x4xf32, #tpu.memory_space<vmem>>, %arg4: memref<8x1xf32, #tpu.memory_space<vmem>>, %arg5: memref<2x8x128xf32, #tpu.memory_space<vmem>>) attributes {dimension_semantics = [#tpu.dimension_semantics<parallel>, #tpu.dimension_semantics<parallel>], iteration_bounds = array<i64: 1, 2>, scalar_prefetch = 0 : i64, scratch_operands = 0 : i64, tpu.core_type = #tpu.core_type<tc>, window_params = [{transform_indices = @transform_0, window_bounds = array<i64: 2, 4, 128>}, {pipeline_mode = #tpu.pipeline_mode<synchronous>, transform_indices = @transform_1, window_bounds = array<i64: 8, 4>}, {pipeline_mode = #tpu.pipeline_mode<synchronous>, transform_indices = @transform_2, window_bounds = array<i64: 8, 1>}, {transform_indices = @transform_3, window_bounds = array<i64: 2, 8, 128>}]} {
    %c0 = arith.constant 0 : index
    %c0_0 = arith.constant 0 : index
    %0 = vector.load %arg3[%c0, %c0_0] : memref<8x4xf32, #tpu.memory_space<vmem>>, vector<8x4xf32>
    %c0_1 = arith.constant 0 : index
    %c0_2 = arith.constant 0 : index
    %1 = vector.load %arg4[%c0_1, %c0_2] : memref<8x1xf32, #tpu.memory_space<vmem>>, vector<8x1xf32>
    %c0_3 = arith.constant 0 : index
    %c0_4 = arith.constant 0 : index
    %c0_5 = arith.constant 0 : index
    %2 = vector.load %arg2[%c0_3, %c0_4, %c0_5] : memref<2x4x128xf32, #tpu.memory_space<vmem>>, vector<1x4x128xf32>
    %3 = vector.shape_cast %2 : vector<1x4x128xf32> to vector<4x128xf32>
    %cst = arith.constant dense<0.000000e+00> : vector<8x128xf32>
    %4 = tpu.matmul %0, %3, %cst {dimension_numbers = #tpu.dot_dimension_numbers<[1], [0], [0], [1], [0, 0, 1, 1], [], []>} : vector<8x4xf32>, vector<4x128xf32>, vector<8x128xf32> -> vector<8x128xf32>
    %5 = vector.broadcast %1 : vector<8x1xf32> to vector<8x128xf32>
    %6 = arith.addf %4, %5 : vector<8x128xf32>
    %c0_6 = arith.constant 0 : index
    %c0_7 = arith.constant 0 : index
    %c0_8 = arith.constant 0 : index
    %7 = vector.load %arg5[%c0_6, %c0_7, %c0_8] : memref<2x8x128xf32, #tpu.memory_space<vmem>>, vector<1x8x128xf32>
    %8 = vector.shape_cast %7 : vector<1x8x128xf32> to vector<8x128xf32>
    %9 = vector.shape_cast %6 : vector<8x128xf32> to vector<1x8x128xf32>
    tpu.vector_store %arg5[%c0_6, %c0_7, %c0_8], %9 {strides = array<i32>} : memref<2x8x128xf32, #tpu.memory_space<vmem>>, vector<1x8x128xf32>,
    %c1 = arith.constant 1 : index
    %c0_9 = arith.constant 0 : index
    %c0_10 = arith.constant 0 : index
    %10 = vector.load %arg2[%c1, %c0_9, %c0_10] : memref<2x4x128xf32, #tpu.memory_space<vmem>>, vector<1x4x128xf32>
    %11 = vector.shape_cast %10 : vector<1x4x128xf32> to vector<4x128xf32>
    %cst_11 = arith.constant dense<0.000000e+00> : vector<8x128xf32>
    %12 = tpu.matmul %0, %11, %cst_11 {dimension_numbers = #tpu.dot_dimension_numbers<[1], [0], [0], [1], [0, 0, 1, 1], [], []>} : vector<8x4xf32>, vector<4x128xf32>, vector<8x128xf32> -> vector<8x128xf32>
    %13 = vector.broadcast %1 : vector<8x1xf32> to vector<8x128xf32>
    %14 = arith.addf %12, %13 : vector<8x128xf32>
    %c1_12 = arith.constant 1 : index
    %c0_13 = arith.constant 0 : index
    %c0_14 = arith.constant 0 : index
    %15 = vector.load %arg5[%c1_12, %c0_13, %c0_14] : memref<2x8x128xf32, #tpu.memory_space<vmem>>, vector<1x8x128xf32>
    %16 = vector.shape_cast %15 : vector<1x8x128xf32> to vector<8x128xf32>
    %17 = vector.shape_cast %14 : vector<8x128xf32> to vector<1x8x128xf32>
    tpu.vector_store %arg5[%c1_12, %c0_13, %c0_14], %17 {strides = array<i32>} : memref<2x8x128xf32, #tpu.memory_space<vmem>>, vector<1x8x128xf32>,
    return
  }
  func.func @transform_0(%arg0: i32, %arg1: i32) -> (i32, i32, i32) {
    %c0_i32 = arith.constant 0 : i32
    %c0_i32_0 = arith.constant 0 : i32
    return %arg0, %c0_i32, %arg1 : i32, i32, i32
  }
  func.func @transform_1(%arg0: i32, %arg1: i32) -> (i32, i32) {
    %c0_i32 = arith.constant 0 : i32
    %c0_i32_0 = arith.constant 0 : i32
    %c0_i32_1 = arith.constant 0 : i32
    return %c0_i32, %c0_i32_0 : i32, i32
  }
  func.func @transform_2(%arg0: i32, %arg1: i32) -> (i32, i32) {
    %c0_i32 = arith.constant 0 : i32
    %c0_i32_0 = arith.constant 0 : i32
    %c0_i32_1 = arith.constant 0 : i32
    return %c0_i32, %c0_i32_0 : i32, i32
  }
  func.func @transform_3(%arg0: i32, %arg1: i32) -> (i32, i32, i32) {
    %c0_i32 = arith.constant 0 : i32
    %c0_i32_0 = arith.constant 0 : i32
    return %arg0, %c0_i32, %arg1 : i32, i32, i32
  }
}

</mosaic_0001>

<llo_original>
// kernel: tpu_custom_call.1
$region0: #{tpu_custom_call.1}
  #allocation0 [shape = 'u32[]', space=smem, size = 0x4, offset = 0x4, fixed_abs, tag = 'smem constant byte address 0x4 - core index']
  #allocation1 [shape = 'u32[144,128]{1,0:T(1,128)}', space=vmem, size = 0x12000, scoped, tag = 'internal scratch']
  %s0 = inlined_call_operand.vmem [shape: f32[2,4,256], index: 0, kind: input, shape index: {}]
  %s1 = inlined_call_operand.vmem [shape: f32[8,4], index: 1, kind: input, shape index: {}]
  %s2 = inlined_call_operand.vmem [shape: f32[8,1], index: 2, kind: input, shape index: {}]
  %s3 = inlined_call_operand.hbm [shape: f32[2,8,256], index: 3, kind: output, shape index: {}]
  %s4 = sld [smem:[#allocation0]]
  $region86: #{tpu_custom_call.1} parent=0
    _
  %s6 = ssub.s32 1, %s4
  %s7 = scalar_select 0, %s6, %s4
  $region1: #{tpu_custom_call.1} parent=0
    #allocation2 [shape = 'u8[8192]{0}', space=vmem, size = 0x2000, scoped, tag = 'input window, operand 0']
    #allocation3 [shape = 'u8[16384]{0}', space=vmem, size = 0x4000, scoped, tag = 'output window, operand 0']
    #allocation4 [shape = 's32[2]{0}', space=sflag, size = 0x8, scoped, tag = 'scoped memory for tpu_custom_call.1']
    %8 = vsyncpa [#allocation4], 0
    %s9 = scalar_lea.sflag [#allocation4], 1
    %10 = vsyncpa %s9, 0
    loop: start=0, step=1, limit=4
    $region2: #{tpu_custom_call.1} parent=1 // loop_pre_header
      _
    $region3: #{tpu_custom_call.1} parent=1 // loop_header
      %s12 = sphi 0, %s16
      %p13 = scmp.ge.s32.totalorder %s12, 4
      %s19 = sphi 0, %s31
      %s20 = sphi 0, %s27
      %s21 = sphi 0, %s19
      %s22 = sphi 0, %s20
      %s23 = sphi 0, %s21
      %s24 = sphi 0, %s22
      %s36 = sphi 0, %s38
      %s39 = sphi 0, %s36
      %s40 = sphi 0, %s39
      %s56 = sphi 0, %s40
      %s60 = sphi 0, %s60
      %s62 = sphi 0, %s60
      %s63 = sphi 0, %s62
      %s77 = sphi 0, %s63
      %s81 = sphi 0, %s81
      %s83 = sphi 0, %s81
      %s84 = sphi 0, %s83
      %s98 = sphi 0, %s84
      %s106 = sphi 0, %s108
      %s109 = sphi 0, %s106
      %s110 = sphi 0, %s109
      %s126 = sphi 0, %s110
    $region4: #{tpu_custom_call.1} parent=1 // loop_header_branch
      %15 = sbr.rel (%p13) target = $region8
    $region5: #{tpu_custom_call.1} parent=1 // loop_body
      %s17 = ssub.s32 %s12, 1
      %s18 = ssub.s32 %s12, 2
      %s25 = sadd.s32 1, %s20
      %p26 = scmp.ge.s32.totalorder %s25, 2
      %s27 = scalar_select %p26, 0, %s25
      %s28 = sadd.s32 1, %s19
      %s29 = scalar_select %p26, %s28, %s19
      %p30 = scmp.ge.s32.totalorder %s29, 1
      %s31 = scalar_select %p30, 0, %s29
      %s32 = ssub.s32 %s19, %s31
      %s33 = ssub.s32 %s20, %s27
      %s34 = sor.u32 %s32, %s33
      %p35 = scmp.eq.s32.totalorder %s34, 0
      %s37 = sadd.s32 %s36, 1
      %s38 = scalar_select %p35, %s36, %s37
      %p41 = pneg %p35
      %p42 = scmp.eq.s32.totalorder %s12, 1
      %p43 = por %p41, %p42
      %p44 = scmp.ne.s32.totalorder %s36, %s39
      %p45 = scmp.eq.s32.totalorder %s12, 0
      %p46 = por %p44, %p45
      %p47 = scmp.ne.s32.totalorder %s36, %s39
      %p48 = scmp.eq.s32.totalorder %s17, 1
      %p49 = por %p47, %p48
      %p50 = scmp.ne.s32.totalorder %s39, %s40
      %p51 = scmp.eq.s32.totalorder %s17, 0
      %p52 = por %p50, %p51
      %p53 = scmp.ne.s32.totalorder %s39, %s40
      %p54 = scmp.eq.s32.totalorder %s18, 1
      %p55 = por %p53, %p54
      %p57 = scmp.ne.s32.totalorder %s40, %s56
      %p58 = scmp.eq.s32.totalorder %s18, 0
      %p59 = por %p57, %p58
      %s61 = sadd.s32 %s60, 1
      %p64 = scmp.eq.s32.totalorder %s12, 1
      %p65 = scmp.ne.s32.totalorder %s60, %s62
      %p66 = scmp.eq.s32.totalorder %s12, 0
      %p67 = por %p65, %p66
      %p68 = scmp.ne.s32.totalorder %s60, %s62
      %p69 = scmp.eq.s32.totalorder %s17, 1
      %p70 = por %p68, %p69
      %p71 = scmp.ne.s32.totalorder %s62, %s63
      %p72 = scmp.eq.s32.totalorder %s17, 0
      %p73 = por %p71, %p72
      %p74 = scmp.ne.s32.totalorder %s62, %s63
      %p75 = scmp.eq.s32.totalorder %s18, 1
      %p76 = por %p74, %p75
      %p78 = scmp.ne.s32.totalorder %s63, %s77
      %p79 = scmp.eq.s32.totalorder %s18, 0
      %p80 = por %p78, %p79
      %s82 = sadd.s32 %s81, 1
      %p85 = scmp.eq.s32.totalorder %s12, 1
      %p86 = scmp.ne.s32.totalorder %s81, %s83
      %p87 = scmp.eq.s32.totalorder %s12, 0
      %p88 = por %p86, %p87
      %p89 = scmp.ne.s32.totalorder %s81, %s83
      %p90 = scmp.eq.s32.totalorder %s17, 1
      %p91 = por %p89, %p90
      %p92 = scmp.ne.s32.totalorder %s83, %s84
      %p93 = scmp.eq.s32.totalorder %s17, 0
      %p94 = por %p92, %p93
      %p95 = scmp.ne.s32.totalorder %s83, %s84
      %p96 = scmp.eq.s32.totalorder %s18, 1
      %p97 = por %p95, %p96
      %p99 = scmp.ne.s32.totalorder %s84, %s98
      %p100 = scmp.eq.s32.totalorder %s18, 0
      %p101 = por %p99, %p100
      %s102 = ssub.s32 %s19, %s31
      %s103 = ssub.s32 %s20, %s27
      %s104 = sor.u32 %s102, %s103
      %p105 = scmp.eq.s32.totalorder %s104, 0
      %s107 = sadd.s32 %s106, 1
      %s108 = scalar_select %p105, %s106, %s107
      %p111 = pneg %p105
      %p112 = scmp.eq.s32.totalorder %s12, 1
      %p113 = por %p111, %p112
      %p114 = scmp.ne.s32.totalorder %s106, %s109
      %p115 = scmp.eq.s32.totalorder %s12, 0
      %p116 = por %p114, %p115
      %p117 = scmp.ne.s32.totalorder %s106, %s109
      %p118 = scmp.eq.s32.totalorder %s17, 1
      %p119 = por %p117, %p118
      %p120 = scmp.ne.s32.totalorder %s109, %s110
      %p121 = scmp.eq.s32.totalorder %s17, 0
      %p122 = por %p120, %p121
      %p123 = scmp.ne.s32.totalorder %s109, %s110
      %p124 = scmp.eq.s32.totalorder %s18, 1
      %p125 = por %p123, %p124
      %p127 = scmp.ne.s32.totalorder %s110, %s126
      %p128 = scmp.eq.s32.totalorder %s18, 0
      %p129 = por %p127, %p128
      %p130 = scmp.le.s32.totalorder 1, %s12
      %p131 = scmp.lt.s32.totalorder %s12, 3
      %p132 = pnand %p130, %p131
      %p133 = pneg %p132
      // Predicated region
      $region9: #{tpu_custom_call.1} parent=5 // pred_check
        _
      $region10: #{tpu_custom_call.1} parent=5 // pred_check_branch
        %135 = sbr.rel (%p132) target = $region12
      $region11: #{tpu_custom_call.1} parent=5 // pred_region
        %s136 = ssub.s32 %s12, 1
        // Predicated region
        $region13: #{tpu_custom_call.1} parent=11 // pred_check
          %p137 = pneg %p73
        $region14: #{tpu_custom_call.1} parent=11 // pred_check_branch
          %139 = sbr.rel (%p137) target = $region16
        $region15: #{tpu_custom_call.1} parent=11 // pred_region
          _
        $region16: #{tpu_custom_call.1} parent=11 // pred_fallthru
          _
        // Predicated region
        $region17: #{tpu_custom_call.1} parent=11 // pred_check
          %p140 = pneg %p94
        $region18: #{tpu_custom_call.1} parent=11 // pred_check_branch
          %142 = sbr.rel (%p140) target = $region20
        $region19: #{tpu_custom_call.1} parent=11 // pred_region
          _
        $region20: #{tpu_custom_call.1} parent=11 // pred_fallthru
          _
      $region12: #{tpu_custom_call.1} parent=5 // pred_fallthru
        _
      %p143 = scmp.lt.s32.totalorder %s12, 2
      // Predicated region
      $region21: #{tpu_custom_call.1} parent=5 // pred_check
        %p144 = pneg %p143
      $region22: #{tpu_custom_call.1} parent=5 // pred_check_branch
        %146 = sbr.rel (%p144) target = $region24
      $region23: #{tpu_custom_call.1} parent=5 // pred_region
        // Predicated region
        $region25: #{tpu_custom_call.1} parent=23 // pred_check
          %p147 = pneg %p46
        $region26: #{tpu_custom_call.1} parent=23 // pred_check_branch
          %149 = sbr.rel (%p147) target = $region28
        $region27: #{tpu_custom_call.1} parent=23 // pred_region
          %s150 = sand.u32 %s36, 1
          %s151 = sand.u32 %s36, 1
          %s152 = smul.addr %s151, 8
          %s153 = scalar_lea.vmem [#allocation2], %s152
          %s154 = smul.u32 2, %s19
          %s155 = smul.addr %s154, 2
          %s156 = sadd.s32 %s20, %s155
          %s157 = smul.addr %s156, 4
          %s158 = scalar_lea.vmem %s0, %s157
          // Predicated region
          $region29: #{tpu_custom_call.1} parent=27 // pred_check
            _
          $region30: #{tpu_custom_call.1} parent=27 // pred_check_branch
            %160 = sbr.rel (0) target = $region32
          $region31: #{tpu_custom_call.1} parent=27 // pred_region
            // Predicated region
            $region33: #{tpu_custom_call.1} parent=31 // pred_check
              _
            $region34: #{tpu_custom_call.1} parent=31 // pred_check_branch
              %162 = sbr.rel target = $region36
            $region35: #{tpu_custom_call.1} parent=31 // pred_region
              // Predicated region
              $region48: #{tpu_custom_call.1} parent=35 // pred_check
                _
              $region49: #{tpu_custom_call.1} parent=35 // pred_check_branch
                %180 = sbr.rel (0) target = $region51
              $region50: #{tpu_custom_call.1} parent=35 // pred_region
                loop: start=0, step=1, limit=1
                $region52: #{tpu_custom_call.1} parent=50 // loop_pre_header
                  _
                $region53: #{tpu_custom_call.1} parent=50 // loop_header
                  %s182 = sphi 0, %s186
                  %p183 = scmp.ge.s32.totalorder %s182, 1
                  %s187 = sphi %s158, %s158
                  %s188 = sphi %s153, %s153
                $region54: #{tpu_custom_call.1} parent=50 // loop_header_branch
                  %185 = sbr.rel (%p183) target = $region58
                $region55: #{tpu_custom_call.1} parent=50 // loop_body
                  _
                $region56: #{tpu_custom_call.1} parent=50 // loop_footer
                  %s186 = sadd.s32 1, %s182
                $region57: #{tpu_custom_call.1} parent=50 // loop_footer_branch
                  %181 = sbr.rel target = $region53
                $region58: #{tpu_custom_call.1} parent=50 // loop_exit
                  _
                %s190 = ssub.s32 16, 1
                loop: start=0, step=1, limit=1
                $region59: #{tpu_custom_call.1} parent=50 // loop_pre_header
                  _
                $region60: #{tpu_custom_call.1} parent=50 // loop_header
                  %s192 = sphi 0, %s196
                  %p193 = scmp.ge.s32.totalorder %s192, 1
                  %s197 = sphi %s158, %s158
                  %s198 = sphi %s153, %s153
                $region61: #{tpu_custom_call.1} parent=50 // loop_header_branch
                  %195 = sbr.rel (%p193) target = $region65
                $region62: #{tpu_custom_call.1} parent=50 // loop_body
                  %v199 = vld [vmem:[%s197] sm:%s190]
                  %200 = vst [vmem:[%s198] sm:%s190] %v199
                  %v201 = vld [vmem:[%s197 + $0x8] sm:%s190]
                  %202 = vst [vmem:[%s198 + $0x4] sm:%s190] %v201
                $region63: #{tpu_custom_call.1} parent=50 // loop_footer
                  %s196 = sadd.s32 1, %s192
                $region64: #{tpu_custom_call.1} parent=50 // loop_footer_branch
                  %191 = sbr.rel target = $region60
                $region65: #{tpu_custom_call.1} parent=50 // loop_exit
                  _
              $region51: #{tpu_custom_call.1} parent=35 // pred_fallthru
                _
            $region36: #{tpu_custom_call.1} parent=31 // pred_fallthru
              _
            // Predicated region
            $region37: #{tpu_custom_call.1} parent=31 // pred_check
              _
            $region38: #{tpu_custom_call.1} parent=31 // pred_check_branch
              %164 = sbr.rel (0) target = $region40
            $region39: #{tpu_custom_call.1} parent=31 // pred_region
              %s166 = ssub.s32 16, 1
              loop: start=0, step=1, limit=1
              $region41: #{tpu_custom_call.1} parent=39 // loop_pre_header
                _
              $region42: #{tpu_custom_call.1} parent=39 // loop_header
                %s168 = sphi 0, %s172
                %p169 = scmp.ge.s32.totalorder %s168, 1
                %s173 = sphi %s158, %s158
                %s174 = sphi %s153, %s153
              $region43: #{tpu_custom_call.1} parent=39 // loop_header_branch
                %171 = sbr.rel (%p169) target = $region47
              $region44: #{tpu_custom_call.1} parent=39 // loop_body
                %v175 = vld [vmem:[%s173] sm:%s166]
                %176 = vst [vmem:[%s174] sm:%s166] %v175
                %v177 = vld [vmem:[%s173 + $0x8] sm:%s166]
                %178 = vst [vmem:[%s174 + $0x4] sm:%s166] %v177
              $region45: #{tpu_custom_call.1} parent=39 // loop_footer
                %s172 = sadd.s32 1, %s168
              $region46: #{tpu_custom_call.1} parent=39 // loop_footer_branch
                %167 = sbr.rel target = $region42
              $region47: #{tpu_custom_call.1} parent=39 // loop_exit
                _
            $region40: #{tpu_custom_call.1} parent=31 // pred_fallthru
              _
          $region32: #{tpu_custom_call.1} parent=27 // pred_fallthru
            _
          %203 = vnop
        $region28: #{tpu_custom_call.1} parent=23 // pred_fallthru
          _
      $region24: #{tpu_custom_call.1} parent=5 // pred_fallthru
        _
      %p204 = scmp.le.s32.totalorder 1, %s12
      %p205 = scmp.lt.s32.totalorder %s12, 3
      %p206 = pnand %p204, %p205
      %p207 = pneg %p206
      // Predicated region
      $region66: #{tpu_custom_call.1} parent=5 // pred_check
        _
      $region67: #{tpu_custom_call.1} parent=5 // pred_check_branch
        %209 = sbr.rel (%p206) target = $region69
      $region68: #{tpu_custom_call.1} parent=5 // pred_region
        %s210 = ssub.s32 %s12, 1
        %s211 = sand.u32 %s39, 1
        %s212 = sand.u32 %s39, 1
        %s213 = smul.addr %s212, 8
        %s214 = scalar_lea.vmem [#allocation2], %s213
        // Predicated region
        $region70: #{tpu_custom_call.1} parent=68 // pred_check
          %p215 = pneg %p52
        $region71: #{tpu_custom_call.1} parent=68 // pred_check_branch
          %217 = sbr.rel (%p215) target = $region73
        $region72: #{tpu_custom_call.1} parent=68 // pred_region
          _
        $region73: #{tpu_custom_call.1} parent=68 // pred_fallthru
          _
        %s218 = sand.u32 %s39, 1
        %s219 = sand.u32 %s39, 1
        %s220 = smul.addr %s219, 8
        %s221 = scalar_lea.vmem [#allocation2], %s220
        %p222 = pneg %p52
        %p223 = pneg %p49
        %p224 = pneg %p73
        %p225 = pneg %p70
        %p226 = pneg %p94
        %p227 = pneg %p91
        %p228 = pneg %p122
        %p229 = pneg %p119
        %s230 = sand.u32 %s109, 1
        %s231 = scalar_lea.sflag [#allocation4], %s230
        %s232 = sand.u32 %s109, 1
        %s233 = smul.addr %s232, 16
        %s234 = scalar_lea.vmem [#allocation3], %s233
        %s235 = smul.u32 2, %s21
        %s236 = smul.u32 2, %s21
        %v237 = vld [vmem:[%s1] sm:$0xff]
        %v238 = vld [vmem:[%s2] sm:$0xff]
        %v239 = vld [vmem:[%s214] sm:$0xf]
        %241 = vset.pattern.permute.xlu0 0
        %242 = vperm.xlu0 %241, %v238
        %v243 = vpop.permute.xlu0 %242
        %vm245 = vcmask 31744
        %v247 = vsel %vm245, %v237, 0
        %vm249 = vcmask 1043456
        %v251 = vsel %vm249, %v239, 0
        %253 = vmatprep.subr.mxu0 0.0
        %254 = vmatpush1.msra.mxu0 0.0
        %255 = vmatprep.subr.mxu0 0.0
        %256 = vmatpush1.msra.mxu0 0.0
        %257 = vmatprep.subr.mxu0 0.0
        %258 = vmatpush1.msra.mxu0 0.0
        %259 = vmatprep.subr.mxu0 0.0
        %260 = vmatpush1.msra.mxu0 0.0
        %261 = vmatprep.subr.mxu0 0.0
        %262 = vmatpush1.msra.mxu0 0.0
        %263 = vmatprep.subr.mxu0 0.0
        %264 = vmatpush1.msra.mxu0 0.0
        %265 = vmatprep.subr.mxu0 0.0
        %266 = vmatpush1.msra.mxu0 0.0
        %267 = vmatprep.subr.mxu0 0.0
        %268 = vmatpush1.msra.mxu0 0.0
        %269 = vmatprep.subr.mxu0 0.0
        %270 = vmatpush1.msra.mxu0 0.0
        %271 = vmatprep.subr.mxu0 0.0
        %272 = vmatpush1.msra.mxu0 0.0
        %273 = vmatprep.subr.mxu0 0.0
        %274 = vmatpush1.msra.mxu0 0.0
        %275 = vmatprep.subr.mxu0 0.0
        %276 = vmatpush1.msra.mxu0 0.0
        %277 = vmatprep.subr.mxu0 0.0
        %278 = vmatpush1.msra.mxu0 0.0
        %279 = vmatprep.subr.mxu0 0.0
        %280 = vmatpush1.msra.mxu0 0.0
        %281 = vmatprep.subr.mxu0 0.0
        %282 = vmatpush1.msra.mxu0 0.0
        %283 = vmatprep.subr.mxu0 0.0
        %284 = vmatpush1.msra.mxu0 %v251
        %285 = vmatprep.subr.mxu0 0.0
        %286 = vmatpush2.msra.mxu0 0.0
        %287 = vmatprep.subr.mxu0 0.0
        %288 = vmatpush2.msra.mxu0 0.0
        %289 = vmatprep.subr.mxu0 0.0
        %290 = vmatpush2.msra.mxu0 0.0
        %291 = vmatprep.subr.mxu0 0.0
        %292 = vmatpush2.msra.mxu0 0.0
        %293 = vmatprep.subr.mxu0 0.0
        %294 = vmatpush2.msra.mxu0 0.0
        %295 = vmatprep.subr.mxu0 0.0
        %296 = vmatpush2.msra.mxu0 0.0
        %297 = vmatprep.subr.mxu0 0.0
        %298 = vmatpush2.msra.mxu0 0.0
        %299 = vmatprep.subr.mxu0 0.0
        %300 = vmatpush2.msra.mxu0 0.0
        %301 = vmatprep.subr.mxu0 0.0
        %302 = vmatpush2.msra.mxu0 0.0
        %303 = vmatprep.subr.mxu0 0.0
        %304 = vmatpush2.msra.mxu0 0.0
        %305 = vmatprep.subr.mxu0 0.0
        %306 = vmatpush2.msra.mxu0 0.0
        %307 = vmatprep.subr.mxu0 0.0
        %308 = vmatpush2.msra.mxu0 0.0
        %309 = vmatprep.subr.mxu0 0.0
        %310 = vmatpush2.msra.mxu0 0.0
        %311 = vmatprep.subr.mxu0 0.0
        %312 = vmatpush2.msra.mxu0 0.0
        %313 = vmatprep.subr.mxu0 0.0
        %314 = vmatpush2.msra.mxu0 0.0
        %315 = vmatprep.subr.mxu0 0.0
        %316 = vmatpush2.msra.mxu0 0.0
        %317 = vmatprep.mubr.f32.mxu0 0.0
        %318 = vmatmul.mubr.f32.gmra.mxu0 %v247
        %v319 = vpop.f32.mrf.mxu0
        %v320 = vadd.f32 %v243, %v319
        %v321 = vpop.f32.mrf.mxu0
        %322 = vdwg.mxu0
        %323 = vst [vmem:[%s234] sm:$0xff] %v320
        %s324 = scalar_lea.vmem %s214, 4 [#allocation2]
        %v325 = vld [vmem:[%s324] sm:$0xf]
        %v327 = vsel %vm249, %v325, 0
        %329 = vmatprep.subr.mxu0 0.0
        %330 = vmatpush1.msra.mxu0 0.0
        %331 = vmatprep.subr.mxu0 0.0
        %332 = vmatpush1.msra.mxu0 0.0
        %333 = vmatprep.subr.mxu0 0.0
        %334 = vmatpush1.msra.mxu0 0.0
        %335 = vmatprep.subr.mxu0 0.0
        %336 = vmatpush1.msra.mxu0 0.0
        %337 = vmatprep.subr.mxu0 0.0
        %338 = vmatpush1.msra.mxu0 0.0
        %339 = vmatprep.subr.mxu0 0.0
        %340 = vmatpush1.msra.mxu0 0.0
        %341 = vmatprep.subr.mxu0 0.0
        %342 = vmatpush1.msra.mxu0 0.0
        %343 = vmatprep.subr.mxu0 0.0
        %344 = vmatpush1.msra.mxu0 0.0
        %345 = vmatprep.subr.mxu0 0.0
        %346 = vmatpush1.msra.mxu0 0.0
        %347 = vmatprep.subr.mxu0 0.0
        %348 = vmatpush1.msra.mxu0 0.0
        %349 = vmatprep.subr.mxu0 0.0
        %350 = vmatpush1.msra.mxu0 0.0
        %351 = vmatprep.subr.mxu0 0.0
        %352 = vmatpush1.msra.mxu0 0.0
        %353 = vmatprep.subr.mxu0 0.0
        %354 = vmatpush1.msra.mxu0 0.0
        %355 = vmatprep.subr.mxu0 0.0
        %356 = vmatpush1.msra.mxu0 0.0
        %357 = vmatprep.subr.mxu0 0.0
        %358 = vmatpush1.msra.mxu0 0.0
        %359 = vmatprep.subr.mxu0 0.0
        %360 = vmatpush1.msra.mxu0 %v327
        %361 = vmatprep.subr.mxu0 0.0
        %362 = vmatpush2.msra.mxu0 0.0
        %363 = vmatprep.subr.mxu0 0.0
        %364 = vmatpush2.msra.mxu0 0.0
        %365 = vmatprep.subr.mxu0 0.0
        %366 = vmatpush2.msra.mxu0 0.0
        %367 = vmatprep.subr.mxu0 0.0
        %368 = vmatpush2.msra.mxu0 0.0
        %369 = vmatprep.subr.mxu0 0.0
        %370 = vmatpush2.msra.mxu0 0.0
        %371 = vmatprep.subr.mxu0 0.0
        %372 = vmatpush2.msra.mxu0 0.0
        %373 = vmatprep.subr.mxu0 0.0
        %374 = vmatpush2.msra.mxu0 0.0
        %375 = vmatprep.subr.mxu0 0.0
        %376 = vmatpush2.msra.mxu0 0.0
        %377 = vmatprep.subr.mxu0 0.0
        %378 = vmatpush2.msra.mxu0 0.0
        %379 = vmatprep.subr.mxu0 0.0
        %380 = vmatpush2.msra.mxu0 0.0
        %381 = vmatprep.subr.mxu0 0.0
        %382 = vmatpush2.msra.mxu0 0.0
        %383 = vmatprep.subr.mxu0 0.0
        %384 = vmatpush2.msra.mxu0 0.0
        %385 = vmatprep.subr.mxu0 0.0
        %386 = vmatpush2.msra.mxu0 0.0
        %387 = vmatprep.subr.mxu0 0.0
        %388 = vmatpush2.msra.mxu0 0.0
        %389 = vmatprep.subr.mxu0 0.0
        %390 = vmatpush2.msra.mxu0 0.0
        %391 = vmatprep.subr.mxu0 0.0
        %392 = vmatpush2.msra.mxu0 0.0
        %393 = vmatprep.mubr.f32.mxu0 0.0
        %394 = vmatmul.mubr.f32.gmra.mxu0 %v247
        %v395 = vpop.f32.mrf.mxu0
        %v396 = vadd.f32 %v243, %v395
        %v397 = vpop.f32.mrf.mxu0
        %398 = vdwg.mxu0
        %s399 = scalar_lea.vmem %s234, 8 [#allocation3]
        %400 = vst [vmem:[%s399] sm:$0xff] %v396
        %s401 = sand.u32 %s109, 1
        %s402 = scalar_lea.sflag [#allocation4], %s401
        %s403 = sand.u32 %s109, 1
        %s404 = smul.addr %s403, 16
        %s405 = scalar_lea.vmem [#allocation3], %s404
        // Predicated region
        $region74: #{tpu_custom_call.1} parent=68 // pred_check
          %p406 = pneg %p119
        $region75: #{tpu_custom_call.1} parent=68 // pred_check_branch
          %408 = sbr.rel (%p406) target = $region77
        $region76: #{tpu_custom_call.1} parent=68 // pred_region
          %s409 = smul.u32 2, %s21
          %s411 = ssub.s32 256, 256
          %412 = vsyncadd %s402, %s411
          %s413 = smul.addr %s409, 2
          %s414 = sadd.s32 %s22, %s413
          %s415 = smul.addr %s414, 128
          %s416 = scalar_lea.hbm %s3, %s415
          %s417 = sshll.u32 %s405, 4
          %s418 = int_to_ptr.vmem [resolvable:$true] %s417
          %423 = dma.vmem_to_hbm [thread:$0]  %s418, 256, %s416, %s402, 128, 256, 8
        $region77: #{tpu_custom_call.1} parent=68 // pred_fallthru
          _
      $region69: #{tpu_custom_call.1} parent=5 // pred_fallthru
        _
      %p424 = scmp.le.s32.totalorder 2, %s12
      // Predicated region
      $region78: #{tpu_custom_call.1} parent=5 // pred_check
        %p425 = pneg %p424
      $region79: #{tpu_custom_call.1} parent=5 // pred_check_branch
        %427 = sbr.rel (%p425) target = $region81
      $region80: #{tpu_custom_call.1} parent=5 // pred_region
        %s428 = ssub.s32 %s12, 2
        // Predicated region
        $region82: #{tpu_custom_call.1} parent=80 // pred_check
          %p429 = pneg %p125
        $region83: #{tpu_custom_call.1} parent=80 // pred_check_branch
          %431 = sbr.rel (%p429) target = $region85
        $region84: #{tpu_custom_call.1} parent=80 // pred_region
          %s432 = sand.u32 %s110, 1
          %s433 = scalar_lea.sflag [#allocation4], %s432
          %s434 = sand.u32 %s110, 1
          %s435 = smul.addr %s434, 16
          %s436 = scalar_lea.vmem [#allocation3], %s435
          %437 = dma.done %s433, 256
        $region85: #{tpu_custom_call.1} parent=80 // pred_fallthru
          _
      $region81: #{tpu_custom_call.1} parent=5 // pred_fallthru
        _
    $region6: #{tpu_custom_call.1} parent=1 // loop_footer
      %s16 = sadd.s32 1, %s12
    $region7: #{tpu_custom_call.1} parent=1 // loop_footer_branch
      %11 = sbr.rel target = $region3
    $region8: #{tpu_custom_call.1} parent=1 // loop_exit
      _
    %438 = vsyncpa [#allocation4], 1
    %s439 = scalar_lea.sflag [#allocation4], 1
    %440 = vsyncpa %s439, 1

</llo_original>
